<compile_context>
chip_gen: v7x
topology: tpu7x:2x2x1
jax: 0.10.0
libtpu: 0.0.40
codegen_flags: <defaults>
</compile_context>

<pallas_src>
import functools

import jax
import jax.numpy as jnp
from jax.experimental import pallas as pl
from jax.experimental.pallas import tpu as pltpu


def tcr_classifier_kernel(x_ref, w1_ref, b1_ref, w2_ref, b2_ref, o_ref, *,
                          compute_dtype):
    """Fused MLP tile: (x @ W1 + b1) -> ReLU -> (h @ W2 + b2)."""
    # Per-tile cast in VMEM (hidden under the x DMA); no wrapper HBM round trip.
    x = x_ref[...].astype(compute_dtype)
    # [TB, D] @ [D, H] -> [TB, H], f32 accumulation on the MXU.
    h = jnp.dot(x, w1_ref[...], preferred_element_type=jnp.float32)
    h = jnp.maximum(h + b1_ref[...], 0.0)            # bias + ReLU on the VPU
    # Dropout(p=0.3): identity at inference time.
    # [TB, H] @ [H, C] in native compute_dtype (no per-step w2 recast).
    out = jnp.dot(h.astype(compute_dtype), w2_ref[...],
                  preferred_element_type=jnp.float32)
    o_ref[...] = (out + b2_ref[...]).astype(o_ref.dtype)


def tcr_classifier_forward(x, w1, b1, w2, b2, *, block_b=8192,
                           compute_dtype=jnp.bfloat16, out_dtype=jnp.float32):
    """Wrapper: x [B, D] -> logits [B, C] (out_dtype, default float32)."""
    B, D = x.shape
    H = w1.shape[1]
    C = w2.shape[1]
    assert w1.shape == (D, H) and b1.shape == (1, H)
    assert w2.shape == (H, C) and b2.shape == (1, C)

    # Weights are tiny and VMEM-resident: cast once here (negligible traffic).
    # x is NOT cast here — it streams in native dtype, cast per-tile in-kernel.
    w1 = w1.astype(compute_dtype)
    w2 = w2.astype(compute_dtype)
    b1 = b1.astype(jnp.float32)
    b2 = b2.astype(jnp.float32)

    # Batch tiling WITHOUT padding. Keep grid extent >= 2 when B > 8 so the
    # "parallel" axis actually splits across v7x's two TensorCores.
    if B <= 8:
        tb = B                                   # single full-batch tile
    else:
        half = pl.cdiv(B, 2)
        half = pl.cdiv(half, 8) * 8              # sublane-aligned (multiple of 8)
        tb = min(block_b, half)
    grid_b = pl.cdiv(B, tb)                      # partial last block is masked

    kernel = functools.partial(tcr_classifier_kernel, compute_dtype=compute_dtype)

    out = pl.pallas_call(
        kernel,
        out_shape=jax.ShapeDtypeStruct((B, C), out_dtype),
        grid=(grid_b,),
        in_specs=[
            pl.BlockSpec((tb, D), lambda i: (i, 0)),   # x: streamed per tile
            pl.BlockSpec((D, H), lambda i: (0, 0)),    # W1: resident in VMEM
            pl.BlockSpec((1, H), lambda i: (0, 0)),    # b1: resident
            pl.BlockSpec((H, C), lambda i: (0, 0)),    # W2: resident
            pl.BlockSpec((1, C), lambda i: (0, 0)),    # b2: resident
        ],
        out_specs=pl.BlockSpec((tb, C), lambda i: (i, 0)),
        compiler_params=pltpu.CompilerParams(
            dimension_semantics=("parallel",),  # v7x: shard batch across 2 TCs
            vmem_limit_bytes=32 << 20,
        ),
        cost_estimate=pl.CostEstimate(
            flops=2 * B * D * H + 2 * B * H * C,
            transcendentals=0,
            bytes_accessed=(B * D * x.dtype.itemsize
                            + B * C * jnp.dtype(out_dtype).itemsize
                            + (D * H + H * C) * jnp.dtype(compute_dtype).itemsize
                            + (H + C) * 4),
        ),
    )(x, w1, b1, w2, b2)

    return out


def init_params(key, input_dim=128, hidden_dim=64, num_classes=2):
    """Deterministic init mimicking nn.Linear default (uniform +/- 1/sqrt(fan_in))."""
    k1, k2, k3, k4 = jax.random.split(key, 4)
    bound1 = 1.0 / jnp.sqrt(input_dim)
    bound2 = 1.0 / jnp.sqrt(hidden_dim)
    # Stored as [in, out] (transposed relative to PyTorch's [out, in]) so the
    # kernel can do x @ W directly.
    w1 = jax.random.uniform(k1, (input_dim, hidden_dim), jnp.float32,
                            minval=-bound1, maxval=bound1)
    b1 = jax.random.uniform(k2, (1, hidden_dim), jnp.float32,
                            minval=-bound1, maxval=bound1)
    w2 = jax.random.uniform(k3, (hidden_dim, num_classes), jnp.float32,
                            minval=-bound2, maxval=bound2)
    b2 = jax.random.uniform(k4, (1, num_classes), jnp.float32,
                            minval=-bound2, maxval=bound2)
    return w1, b1, w2, b2


if __name__ == "__main__":
    key = jax.random.PRNGKey(0)
    k_in, k_params = jax.random.split(key)

    batch, input_dim, hidden_dim, num_classes = 2, 128, 64, 2
    x = jax.random.normal(k_in, (batch, input_dim), dtype=jnp.float32)
    w1, b1, w2, b2 = init_params(k_params, input_dim, hidden_dim, num_classes)

    # Pure-JAX f32 reference (eval-mode dropout == identity).
    ref_f32 = jnp.maximum(x @ w1 + b1, 0.0) @ w2 + b2

    # 1) Strict check of the f32 compute path.
    logits_f32 = tcr_classifier_forward(x, w1, b1, w2, b2,
                                        compute_dtype=jnp.float32)
    logits_f32 = jax.block_until_ready(logits_f32)
    assert logits_f32.shape == (batch, num_classes)
    assert jnp.allclose(logits_f32, ref_f32, atol=1e-5, rtol=1e-5)

    # 2) Default path (native-f32 streaming, in-kernel bf16 cast, f32 accum):
    #    compare against a reference computed from the same bf16-rounded
    #    operands, plus a loose check against the full-f32 reference.
    logits = tcr_classifier_forward(x, w1, b1, w2, b2)
    logits = jax.block_until_ready(logits)
    xb = x.astype(jnp.bfloat16).astype(jnp.float32)
    w1b = w1.astype(jnp.bfloat16).astype(jnp.float32)
    w2b = w2.astype(jnp.bfloat16).astype(jnp.float32)
    ref_bf16 = jnp.maximum(xb @ w1b + b1, 0.0) @ w2b + b2
    assert jnp.allclose(logits, ref_bf16, atol=1e-3, rtol=1e-3)
    assert jnp.allclose(logits, ref_f32, atol=1e-1, rtol=1e-1)

    # 3) Multi-tile grid with a partial (masked) last block and NO padding copy:
    #    B=20, tb=8 -> grid=3, last block covers only 4 valid rows.
    xg = jax.random.normal(jax.random.PRNGKey(1), (20, input_dim), jnp.float32)
    logits_g = tcr_classifier_forward(xg, w1, b1, w2, b2, block_b=8,
                                      compute_dtype=jnp.float32)
    logits_g = jax.block_until_ready(logits_g)
    ref_g = jnp.maximum(xg @ w1 + b1, 0.0) @ w2 + b2
    assert logits_g.shape == (20, num_classes)
    assert jnp.allclose(logits_g, ref_g, atol=1e-5, rtol=1e-5)

    # 4) Default tiling on a non-multiple batch (exercises the grid>=2 rule).
    xh = jax.random.normal(jax.random.PRNGKey(2), (20, input_dim), jnp.float32)
    logits_h = tcr_classifier_forward(xh, w1, b1, w2, b2,
                                      compute_dtype=jnp.float32)
    logits_h = jax.block_until_ready(logits_h)
    ref_h = jnp.maximum(xh @ w1 + b1, 0.0) @ w2 + b2
    assert jnp.allclose(logits_h, ref_h, atol=1e-5, rtol=1e-5)

    print("KERNEL_OK")
</pallas_src>

<mosaic_0001>
module attributes {stable_mosaic.version = 11 : i64} {
  func.func @tcr_classifier_kernel(%arg0: i32, %arg1: memref<2x128xf32, #tpu.memory_space<vmem>>, %arg2: memref<128x64xf32, #tpu.memory_space<vmem>>, %arg3: memref<1x64xf32, #tpu.memory_space<vmem>>, %arg4: memref<64x2xf32, #tpu.memory_space<vmem>>, %arg5: memref<1x2xf32, #tpu.memory_space<vmem>>, %arg6: memref<2x2xf32, #tpu.memory_space<vmem>>) attributes {dimension_semantics = [#tpu.dimension_semantics<parallel>], iteration_bounds = array<i64: 1>, scalar_prefetch = 0 : i64, scratch_operands = 0 : i64, tpu.core_type = #tpu.core_type<tc>, window_params = [{transform_indices = @transform_0, window_bounds = array<i64: 2, 128>}, {pipeline_mode = #tpu.pipeline_mode<synchronous>, transform_indices = @transform_1, window_bounds = array<i64: 128, 64>}, {pipeline_mode = #tpu.pipeline_mode<synchronous>, transform_indices = @transform_2, window_bounds = array<i64: 1, 64>}, {pipeline_mode = #tpu.pipeline_mode<synchronous>, transform_indices = @transform_3, window_bounds = array<i64: 64, 2>}, {pipeline_mode = #tpu.pipeline_mode<synchronous>, transform_indices = @transform_4, window_bounds = array<i64: 1, 2>}, {transform_indices = @transform_5, window_bounds = array<i64: 2, 2>}]} {
    %c0 = arith.constant 0 : index
    %c0_0 = arith.constant 0 : index
    %0 = vector.load %arg1[%c0, %c0_0] : memref<2x128xf32, #tpu.memory_space<vmem>>, vector<2x128xf32>
    %c0_1 = arith.constant 0 : index
    %c0_2 = arith.constant 0 : index
    %1 = vector.load %arg2[%c0_1, %c0_2] : memref<128x64xf32, #tpu.memory_space<vmem>>, vector<128x64xf32>
    %cst = arith.constant dense<0.000000e+00> : vector<2x64xf32>
    %2 = tpu.matmul %0, %1, %cst {dimension_numbers = #tpu.dot_dimension_numbers<[1], [0], [0], [1], [0, 0, 1, 1], [], []>} : vector<2x128xf32>, vector<128x64xf32>, vector<2x64xf32> -> vector<2x64xf32>
    %c0_3 = arith.constant 0 : index
    %c0_4 = arith.constant 0 : index
    %3 = vector.load %arg3[%c0_3, %c0_4] : memref<1x64xf32, #tpu.memory_space<vmem>>, vector<1x64xf32>
    %4 = vector.broadcast %3 : vector<1x64xf32> to vector<2x64xf32>
    %5 = arith.addf %2, %4 : vector<2x64xf32>
    %cst_5 = arith.constant 0.000000e+00 : f32
    %6 = vector.broadcast %cst_5 : f32 to vector<2x64xf32>
    %7 = arith.maximumf %5, %6 : vector<2x64xf32>
    %c0_6 = arith.constant 0 : index
    %c0_7 = arith.constant 0 : index
    %8 = vector.load %arg4[%c0_6, %c0_7] : memref<64x2xf32, #tpu.memory_space<vmem>>, vector<64x2xf32>
    %cst_8 = arith.constant dense<0.000000e+00> : vector<2x2xf32>
    %9 = tpu.matmul %7, %8, %cst_8 {dimension_numbers = #tpu.dot_dimension_numbers<[1], [0], [0], [1], [0, 0, 1, 1], [], []>} : vector<2x64xf32>, vector<64x2xf32>, vector<2x2xf32> -> vector<2x2xf32>
    %c0_9 = arith.constant 0 : index
    %c0_10 = arith.constant 0 : index
    %10 = vector.load %arg5[%c0_9, %c0_10] : memref<1x2xf32, #tpu.memory_space<vmem>>, vector<1x2xf32>
    %11 = vector.broadcast %10 : vector<1x2xf32> to vector<2x2xf32>
    %12 = arith.addf %9, %11 : vector<2x2xf32>
    %c0_11 = arith.constant 0 : index
    %c0_12 = arith.constant 0 : index
    %13 = vector.load %arg6[%c0_11, %c0_12] : memref<2x2xf32, #tpu.memory_space<vmem>>, vector<2x2xf32>
    tpu.vector_store %arg6[%c0_11, %c0_12], %12 {strides = array<i32>} : memref<2x2xf32, #tpu.memory_space<vmem>>, vector<2x2xf32>,
    return
  }
  func.func @transform_0(%arg0: i32) -> (i32, i32) {
    %c0_i32 = arith.constant 0 : i32
    %c0_i32_0 = arith.constant 0 : i32
    return %arg0, %c0_i32 : i32, i32
  }
  func.func @transform_1(%arg0: i32) -> (i32, i32) {
    %c0_i32 = arith.constant 0 : i32
    %c0_i32_0 = arith.constant 0 : i32
    %c0_i32_1 = arith.constant 0 : i32
    return %c0_i32, %c0_i32_0 : i32, i32
  }
  func.func @transform_2(%arg0: i32) -> (i32, i32) {
    %c0_i32 = arith.constant 0 : i32
    %c0_i32_0 = arith.constant 0 : i32
    %c0_i32_1 = arith.constant 0 : i32
    return %c0_i32, %c0_i32_0 : i32, i32
  }
  func.func @transform_3(%arg0: i32) -> (i32, i32) {
    %c0_i32 = arith.constant 0 : i32
    %c0_i32_0 = arith.constant 0 : i32
    %c0_i32_1 = arith.constant 0 : i32
    return %c0_i32, %c0_i32_0 : i32, i32
  }
  func.func @transform_4(%arg0: i32) -> (i32, i32) {
    %c0_i32 = arith.constant 0 : i32
    %c0_i32_0 = arith.constant 0 : i32
    %c0_i32_1 = arith.constant 0 : i32
    return %c0_i32, %c0_i32_0 : i32, i32
  }
  func.func @transform_5(%arg0: i32) -> (i32, i32) {
    %c0_i32 = arith.constant 0 : i32
    %c0_i32_0 = arith.constant 0 : i32
    return %arg0, %c0_i32 : i32, i32
  }
}

</mosaic_0001>

<llo_original>
// kernel: tpu_custom_call.1
$region0: #{tpu_custom_call.1}
  #allocation0 [shape = 'u32[]', space=smem, size = 0x4, offset = 0x4, fixed_abs, tag = 'smem constant byte address 0x4 - core index']
  #allocation1 [shape = 'u32[144,128]{1,0:T(1,128)}', space=vmem, size = 0x12000, scoped, tag = 'internal scratch']
  %s0 = inlined_call_operand.vmem [shape: f32[2,128], index: 0, kind: input, shape index: {}]
  %s1 = inlined_call_operand.vmem [shape: f32[128,64], index: 1, kind: input, shape index: {}]
  %s2 = inlined_call_operand.vmem [shape: f32[1,64], index: 2, kind: input, shape index: {}]
  %s3 = inlined_call_operand.vmem [shape: f32[64,2], index: 3, kind: input, shape index: {}]
  %s4 = inlined_call_operand.vmem [shape: f32[1,2], index: 4, kind: input, shape index: {}]
  %s5 = inlined_call_operand.hbm [shape: f32[2,2], index: 5, kind: output, shape index: {}]
  %s6 = sld [smem:[#allocation0]]
  $region30: #{tpu_custom_call.1} parent=0
    _
  %s8 = ssub.s32 1, %s6
  %s9 = scalar_select 0, %s8, %s6
  $region1: #{tpu_custom_call.1} parent=0
    #allocation2 [shape = 'u8[1024]{0}', space=vmem, size = 0x400, scoped, tag = 'output window, operand 0, single buffered']
    #allocation3 [shape = 's32[1]{0}', space=sflag, size = 0x4, scoped, tag = 'scoped memory for tpu_custom_call.1']
    %10 = vsyncpa [#allocation3], 0
    // Predicated region
    $region2: #{tpu_custom_call.1} parent=1 // pred_check
      _
    $region3: #{tpu_custom_call.1} parent=1 // pred_check_branch
      %12 = sbr.rel (0) target = $region5
    $region4: #{tpu_custom_call.1} parent=1 // pred_region
      _
    $region5: #{tpu_custom_call.1} parent=1 // pred_fallthru
      _
    // Predicated region
    $region6: #{tpu_custom_call.1} parent=1 // pred_check
      _
    $region7: #{tpu_custom_call.1} parent=1 // pred_check_branch
      %14 = sbr.rel (0) target = $region9
    $region8: #{tpu_custom_call.1} parent=1 // pred_region
      _
    $region9: #{tpu_custom_call.1} parent=1 // pred_fallthru
      _
    // Predicated region
    $region10: #{tpu_custom_call.1} parent=1 // pred_check
      _
    $region11: #{tpu_custom_call.1} parent=1 // pred_check_branch
      %16 = sbr.rel (0) target = $region13
    $region12: #{tpu_custom_call.1} parent=1 // pred_region
      _
    $region13: #{tpu_custom_call.1} parent=1 // pred_fallthru
      _
    // Predicated region
    $region14: #{tpu_custom_call.1} parent=1 // pred_check
      _
    $region15: #{tpu_custom_call.1} parent=1 // pred_check_branch
      %18 = sbr.rel (0) target = $region17
    $region16: #{tpu_custom_call.1} parent=1 // pred_region
      _
    $region17: #{tpu_custom_call.1} parent=1 // pred_fallthru
      _
    // Predicated region
    $region18: #{tpu_custom_call.1} parent=1 // pred_check
      _
    $region19: #{tpu_custom_call.1} parent=1 // pred_check_branch
      %20 = sbr.rel (0) target = $region21
    $region20: #{tpu_custom_call.1} parent=1 // pred_region
      _
    $region21: #{tpu_custom_call.1} parent=1 // pred_fallthru
      _
    %v21 = vld [vmem:[%s0] sm:$0x3]
    %v22 = vld [vmem:[%s1] sm:$0xff]
    %v23 = vld [vmem:[%s1 + $0x8] sm:$0xff]
    %v24 = vld [vmem:[%s1 + $0x10] sm:$0xff]
    %v25 = vld [vmem:[%s1 + $0x18] sm:$0xff]
    %v26 = vld [vmem:[%s1 + $0x20] sm:$0xff]
    %v27 = vld [vmem:[%s1 + $0x28] sm:$0xff]
    %v28 = vld [vmem:[%s1 + $0x30] sm:$0xff]
    %v29 = vld [vmem:[%s1 + $0x38] sm:$0xff]
    %v30 = vld [vmem:[%s1 + $0x40] sm:$0xff]
    %v31 = vld [vmem:[%s1 + $0x48] sm:$0xff]
    %v32 = vld [vmem:[%s1 + $0x50] sm:$0xff]
    %v33 = vld [vmem:[%s1 + $0x58] sm:$0xff]
    %v34 = vld [vmem:[%s1 + $0x60] sm:$0xff]
    %v35 = vld [vmem:[%s1 + $0x68] sm:$0xff]
    %v36 = vld [vmem:[%s1 + $0x70] sm:$0xff]
    %v37 = vld [vmem:[%s1 + $0x78] sm:$0xff]
    %v38 = vld [vmem:[%s2] sm:$0x1]
    %v40 = vlaneseq
    %v41 = vshrl.u32 %v40, 7
    %v42 = vsub.s32 0, %v41
    %v43 = vrot.slane %v38, %v42
    %45 = vmatprep.subr.mxu0 0.0
    %46 = vmatpush1.msra.mxu0 %v22
    %47 = vmatprep.subr.mxu0 0.0
    %48 = vmatpush1.msra.mxu0 %v23
    %49 = vmatprep.subr.mxu0 0.0
    %50 = vmatpush1.msra.mxu0 %v24
    %51 = vmatprep.subr.mxu0 0.0
    %52 = vmatpush1.msra.mxu0 %v25
    %53 = vmatprep.subr.mxu0 0.0
    %54 = vmatpush1.msra.mxu0 %v26
    %55 = vmatprep.subr.mxu0 0.0
    %56 = vmatpush1.msra.mxu0 %v27
    %57 = vmatprep.subr.mxu0 0.0
    %58 = vmatpush1.msra.mxu0 %v28
    %59 = vmatprep.subr.mxu0 0.0
    %60 = vmatpush1.msra.mxu0 %v29
    %61 = vmatprep.subr.mxu0 0.0
    %62 = vmatpush1.msra.mxu0 %v30
    %63 = vmatprep.subr.mxu0 0.0
    %64 = vmatpush1.msra.mxu0 %v31
    %65 = vmatprep.subr.mxu0 0.0
    %66 = vmatpush1.msra.mxu0 %v32
    %67 = vmatprep.subr.mxu0 0.0
    %68 = vmatpush1.msra.mxu0 %v33
    %69 = vmatprep.subr.mxu0 0.0
    %70 = vmatpush1.msra.mxu0 %v34
    %71 = vmatprep.subr.mxu0 0.0
    %72 = vmatpush1.msra.mxu0 %v35
    %73 = vmatprep.subr.mxu0 0.0
    %74 = vmatpush1.msra.mxu0 %v36
    %75 = vmatprep.subr.mxu0 0.0
    %76 = vmatpush1.msra.mxu0 %v37
    %77 = vmatprep.subr.mxu0 0.0
    %78 = vmatpush1.msra.mxu0 0.0
    %79 = vmatprep.subr.mxu0 0.0
    %80 = vmatpush1.msra.mxu0 0.0
    %81 = vmatprep.subr.mxu0 0.0
    %82 = vmatpush1.msra.mxu0 0.0
    %83 = vmatprep.subr.mxu0 0.0
    %84 = vmatpush1.msra.mxu0 0.0
    %85 = vmatprep.subr.mxu0 0.0
    %86 = vmatpush1.msra.mxu0 0.0
    %87 = vmatprep.subr.mxu0 0.0
    %88 = vmatpush1.msra.mxu0 0.0
    %89 = vmatprep.subr.mxu0 0.0
    %90 = vmatpush1.msra.mxu0 0.0
    %91 = vmatprep.subr.mxu0 0.0
    %92 = vmatpush1.msra.mxu0 0.0
    %93 = vmatprep.subr.mxu0 0.0
    %94 = vmatpush1.msra.mxu0 0.0
    %95 = vmatprep.subr.mxu0 0.0
    %96 = vmatpush1.msra.mxu0 0.0
    %97 = vmatprep.subr.mxu0 0.0
    %98 = vmatpush1.msra.mxu0 0.0
    %99 = vmatprep.subr.mxu0 0.0
    %100 = vmatpush1.msra.mxu0 0.0
    %101 = vmatprep.subr.mxu0 0.0
    %102 = vmatpush1.msra.mxu0 0.0
    %103 = vmatprep.subr.mxu0 0.0
    %104 = vmatpush1.msra.mxu0 0.0
    %105 = vmatprep.subr.mxu0 0.0
    %106 = vmatpush1.msra.mxu0 0.0
    %107 = vmatprep.subr.mxu0 0.0
    %108 = vmatpush1.msra.mxu0 0.0
    %109 = vmatprep.mubr.f32.mxu0 0.0
    %110 = vmatmul.mubr.f32.gmra.mrb[0].mxu0 %v21
    %v111 = vpop.f32.mrb[0].mxu0
    %v112 = vadd.f32 %v43, %v111
    %v113 = vpop.f32.mrb[0].mxu0
    %114 = vdwg.mxu0
    %v115 = vmax.f32 %v112, 0.0
    %v116 = vld [vmem:[%s3] sm:$0xff]
    %v117 = vld [vmem:[%s3 + $0x8] sm:$0xff]
    %v118 = vld [vmem:[%s3 + $0x10] sm:$0xff]
    %v119 = vld [vmem:[%s3 + $0x18] sm:$0xff]
    %v120 = vld [vmem:[%s3 + $0x20] sm:$0xff]
    %v121 = vld [vmem:[%s3 + $0x28] sm:$0xff]
    %v122 = vld [vmem:[%s3 + $0x30] sm:$0xff]
    %v123 = vld [vmem:[%s3 + $0x38] sm:$0xff]
    %v124 = vld [vmem:[%s4] sm:$0x1]
    %v126 = vlaneseq
    %v127 = vshrl.u32 %v126, 7
    %v128 = vsub.s32 0, %v127
    %v129 = vrot.slane %v124, %v128
    %vm131 = vcmask 523264
    %v133 = vsel %vm131, %v115, 0
    %135 = vmatprep.subr.mxu0 0.0
    %136 = vmatpush1.msra.mxu0 %v116
    %137 = vmatprep.subr.mxu0 0.0
    %138 = vmatpush1.msra.mxu0 %v117
    %139 = vmatprep.subr.mxu0 0.0
    %140 = vmatpush1.msra.mxu0 %v118
    %141 = vmatprep.subr.mxu0 0.0
    %142 = vmatpush1.msra.mxu0 %v119
    %143 = vmatprep.subr.mxu0 0.0
    %144 = vmatpush1.msra.mxu0 %v120
    %145 = vmatprep.subr.mxu0 0.0
    %146 = vmatpush1.msra.mxu0 %v121
    %147 = vmatprep.subr.mxu0 0.0
    %148 = vmatpush1.msra.mxu0 %v122
    %149 = vmatprep.subr.mxu0 0.0
    %150 = vmatpush1.msra.mxu0 %v123
    %151 = vmatprep.subr.mxu0 0.0
    %152 = vmatpush1.msra.mxu0 0.0
    %153 = vmatprep.subr.mxu0 0.0
    %154 = vmatpush1.msra.mxu0 0.0
    %155 = vmatprep.subr.mxu0 0.0
    %156 = vmatpush1.msra.mxu0 0.0
    %157 = vmatprep.subr.mxu0 0.0
    %158 = vmatpush1.msra.mxu0 0.0
    %159 = vmatprep.subr.mxu0 0.0
    %160 = vmatpush1.msra.mxu0 0.0
    %161 = vmatprep.subr.mxu0 0.0
    %162 = vmatpush1.msra.mxu0 0.0
    %163 = vmatprep.subr.mxu0 0.0
    %164 = vmatpush1.msra.mxu0 0.0
    %165 = vmatprep.subr.mxu0 0.0
    %166 = vmatpush1.msra.mxu0 0.0
    %167 = vmatprep.subr.mxu0 0.0
    %168 = vmatpush1.msra.mxu0 0.0
    %169 = vmatprep.subr.mxu0 0.0
    %170 = vmatpush1.msra.mxu0 0.0
    %171 = vmatprep.subr.mxu0 0.0
    %172 = vmatpush1.msra.mxu0 0.0
    %173 = vmatprep.subr.mxu0 0.0
    %174 = vmatpush1.msra.mxu0 0.0
    %175 = vmatprep.subr.mxu0 0.0
    %176 = vmatpush1.msra.mxu0 0.0
    %177 = vmatprep.subr.mxu0 0.0
    %178 = vmatpush1.msra.mxu0 0.0
    %179 = vmatprep.subr.mxu0 0.0
    %180 = vmatpush1.msra.mxu0 0.0
    %181 = vmatprep.subr.mxu0 0.0
    %182 = vmatpush1.msra.mxu0 0.0
    %183 = vmatprep.subr.mxu0 0.0
    %184 = vmatpush1.msra.mxu0 0.0
    %185 = vmatprep.subr.mxu0 0.0
    %186 = vmatpush1.msra.mxu0 0.0
    %187 = vmatprep.subr.mxu0 0.0
    %188 = vmatpush1.msra.mxu0 0.0
    %189 = vmatprep.subr.mxu0 0.0
    %190 = vmatpush1.msra.mxu0 0.0
    %191 = vmatprep.subr.mxu0 0.0
    %192 = vmatpush1.msra.mxu0 0.0
    %193 = vmatprep.subr.mxu0 0.0
    %194 = vmatpush1.msra.mxu0 0.0
    %195 = vmatprep.subr.mxu0 0.0
    %196 = vmatpush1.msra.mxu0 0.0
    %197 = vmatprep.subr.mxu0 0.0
    %198 = vmatpush1.msra.mxu0 0.0
    %199 = vmatprep.mubr.f32.mxu0 0.0
    %200 = vmatmul.mubr.f32.gmra.mrb[0].mxu0 %v133
    %v201 = vpop.f32.mrb[0].mxu0
    %v202 = vadd.f32 %v129, %v201
    %v203 = vpop.f32.mrb[0].mxu0
    %204 = vdwg.mxu0
    %vm205 = vcmask 9216
    %206 = vst.msk [vmem:[#allocation2] sm:$0x3] %vm205, %v202
    // Predicated region
    $region22: #{tpu_custom_call.1} parent=1 // pred_check
      _
    $region23: #{tpu_custom_call.1} parent=1 // pred_check_branch
      %208 = sbr.rel (0) target = $region25
    $region24: #{tpu_custom_call.1} parent=1 // pred_region
      %s210 = ssub.s32 32, 32
      %211 = vsyncadd [#allocation3], %s210
      %s213 = sshll.u32 [#allocation2], 4
      %s214 = int_to_ptr.vmem [resolvable:$true] %s213
      %216 = dma.vmem_to_hbm [thread:$0]  %s214, 32, %s5, [#allocation3]
    $region25: #{tpu_custom_call.1} parent=1 // pred_fallthru
      _
    // Predicated region
    $region26: #{tpu_custom_call.1} parent=1 // pred_check
      _
    $region27: #{tpu_custom_call.1} parent=1 // pred_check_branch
      %218 = sbr.rel (0) target = $region29
    $region28: #{tpu_custom_call.1} parent=1 // pred_region
      %219 = dma.done [#allocation3], 32
    $region29: #{tpu_custom_call.1} parent=1 // pred_fallthru
      _
    %220 = vsyncpa [#allocation3], 1

</llo_original>
